<compile_context>
chip_gen: v7x
topology: tpu7x:2x2x1
jax: 0.10.0
libtpu: 0.0.40
codegen_flags: <defaults>
</compile_context>

<pallas_src>
import functools

import jax
import jax.numpy as jnp
from jax.experimental import pallas as pl
from jax.experimental.pallas import tpu as pltpu

LEAKY_SLOPE = 0.01  # F.leaky_relu default negative_slope


def pwc_kernel(wsc_ref, x_ref, theta_ref, w1_ref, b1_ref, w2_ref, b2_ref,
               out_ref, att_ref, *, d, mxu_dtype, single_store):
    """One row-tile of the PWC forward.

    wsc_ref  : (2,) SMEM   [w1, w2] mixing scalars
    x_ref    : (tile_n, 3*d)  concat(a, b, c) -- single lane-dense stream
    theta_ref: (tile_n, 3)
    w1_ref   : (3, d, h)   per-branch fc1 weights (mxu_dtype)
    b1_ref   : (3, 1, h)   per-branch fc1 biases  (f32)
    w2_ref   : (3, 1, h)   per-branch fc2 weights, stored as rows (f32)
    b2_ref   : (1, 3)      per-branch fc2 biases  (f32)
    out_ref  : (tile_n, 3*d)  fused representation
    att_ref  : (tile_n, 3)    softmax attention (the module's `last_att`)
    """
    w1s = wsc_ref[0]
    w2s = wsc_ref[1]

    logits = []
    for k in range(3):                       # static unroll: 3 WeCopy branches
        xk = x_ref[:, k * d:(k + 1) * d].astype(mxu_dtype)
        # fc1 on the MXU: low-precision inputs, f32 accumulation.
        hk = jnp.dot(xk, w1_ref[k], preferred_element_type=jnp.float32) + b1_ref[k]
        hk = jnp.where(hk > 0, hk, LEAKY_SLOPE * hk)           # leaky_relu
        # fc2 (single output unit): f32 VPU multiply + lane reduction, no MXU.
        fk = jnp.sum(hk * w2_ref[k], axis=1, keepdims=True) + b2_ref[:, k:k + 1]
        logits.append(w1s * fk + w2s * theta_ref[:, k:k + 1])  # (tile_n, 1)

    # Width-3 softmax, column-wise on (tile_n, 1) vregs; exact reciprocal so the
    # attention weights sum to 1 (replaces the previous approx=True reciprocal).
    m = jnp.maximum(jnp.maximum(logits[0], logits[1]), logits[2])
    e = [jnp.exp(l - m) for l in logits]
    inv = 1.0 / (e[0] + e[1] + e[2])
    p = [ek * inv for ek in e]

    att_ref[...] = jnp.concatenate(p, axis=1)

    if single_store:
        # 3*d <= 128 (or d not 128-aligned): build the full-width attention map
        # with an iota/select (no lane-shuffling concatenate) -> ONE lane-dense
        # full-block store.
        rows = x_ref.shape[0]
        cols = jax.lax.broadcasted_iota(jnp.int32, (rows, 3 * d), 1)
        full = lambda v: jnp.broadcast_to(v, (rows, 3 * d))
        att_full = jnp.where(cols < d, full(p[0]),
                             jnp.where(cols < 2 * d, full(p[1]), full(p[2])))
        out_ref[...] = (att_full * x_ref[...].astype(jnp.float32)).astype(out_ref.dtype)
    else:
        # d % 128 == 0: three 128-aligned unmasked slice stores, no (tN,3d) temp.
        for k in range(3):
            xk = x_ref[:, k * d:(k + 1) * d].astype(jnp.float32)
            out_ref[:, k * d:(k + 1) * d] = (p[k] * xk).astype(out_ref.dtype)


def _round_up(x, m):
    return ((x + m - 1) // m) * m


def _choose_tile_n(n, d, h, *, vmem_budget_bytes=12 * 1024 * 1024, max_tile=1024):
    """Largest row tile whose double-buffered working set fits the VMEM budget.

    Per-row bytes (f32): x-in + out double-buffered ~ 12*d*4, hidden ~ 3*h*4,
    full-width temp ~ 3*d*4, plus theta/att/slack.
    """
    per_row = 4 * (12 * d + 3 * h + 3 * d + 48)
    tile = vmem_budget_bytes // max(per_row, 1)
    tile = min(tile, max_tile, _round_up(n, 8))
    if n >= 16:
        # Keep >= 2 grid steps so the "parallel" row axis can be split across the
        # two TensorCores of a v7x megacore (no effect on single-TC v5e/v6e).
        tile = min(tile, _round_up((n + 1) // 2, 8))
    return int(max(8, tile - tile % 8))


def pwc_forward(a, b, c, theta, params, w1_scalar, w2_scalar, *,
                io_dtype=jnp.float32, mxu_dtype=jnp.bfloat16, tile_n=None):
    """PWC forward.  Returns (fused_representation, att).

    `att` is the (N, 3) softmax the torch module stores as `self.last_att`;
    mutating module state has no Pallas equivalent, so the caller stashes it.
    params: (in, out)-layout weights/biases of the three WeCopy MLPs.
    """
    n, d = a.shape
    h = params["w1a"].shape[1]

    # One lane-dense (N, 3D) stream instead of three lane-sparse (N, D) DMAs.
    x = jnp.concatenate([a, b, c], axis=1).astype(io_dtype)
    theta_f = theta.astype(jnp.float32)

    # Stack the three tiny WeCopy MLPs (no 9x block-diagonal weight blow-up).
    w1_stack = jnp.stack([params["w1a"], params["w1b"], params["w1c"]]).astype(mxu_dtype)    # (3,D,H)
    b1_stack = jnp.stack([params["b1a"], params["b1b"], params["b1c"]]).astype(jnp.float32)  # (3,1,H)
    w2_stack = jnp.stack([params["w2a"].T, params["w2b"].T,
                          params["w2c"].T]).astype(jnp.float32)                              # (3,1,H)
    b2_cat = jnp.concatenate([params["b2a"], params["b2b"],
                              params["b2c"]], axis=1).astype(jnp.float32)                    # (1,3)

    # Mixing scalars via SMEM: update_w() changing them never forces a recompile.
    # (Folding w1 into w2_stack would save ~one VPU mul/step; skipped to keep the
    #  scalar path independent of the mxu_dtype rounding.)
    wscale = jnp.asarray([w1_scalar, w2_scalar], dtype=jnp.float32)                          # (2,)

    if tile_n is None:
        tile_n = _choose_tile_n(n, d, h)
    tile_n = max(8, min(tile_n, _round_up(n, 8)))
    tile_n -= tile_n % 8
    n_pad = _round_up(n, tile_n)
    if n_pad != n:   # ragged N: pad rows instead of requiring tile_n | N
        x = jnp.pad(x, ((0, n_pad - n), (0, 0)))
        theta_f = jnp.pad(theta_f, ((0, n_pad - n), (0, 0)))

    single_store = (3 * d <= 128) or (d % 128 != 0)

    kernel = functools.partial(pwc_kernel, d=d, mxu_dtype=mxu_dtype,
                               single_store=single_store)

    const = lambda shape: pl.BlockSpec(shape, lambda i: (0,) * len(shape))
    grid_spec = pltpu.PrefetchScalarGridSpec(
        num_scalar_prefetch=0,
        grid=(n_pad // tile_n,),
        in_specs=[
            pl.BlockSpec(memory_space=pltpu.MemorySpace.SMEM),   # [w1, w2] scalars
            pl.BlockSpec((tile_n, 3 * d), lambda i: (i, 0)),     # x = concat(a,b,c)
            pl.BlockSpec((tile_n, 3), lambda i: (i, 0)),         # theta
            # Weights are grid-invariant (constant index_map). If 3*D*H bytes ever
            # becomes MiB-scale (esp. under v7x's 64 MiB VMEM), single-buffer them
            # with pipeline_mode=pl.Buffered(1) and/or tile the hidden dim.
            const((3, d, h)),                                    # fc1 weights
            const((3, 1, h)),                                    # fc1 biases
            const((3, 1, h)),                                    # fc2 weights (rows)
            const((1, 3)),                                       # fc2 biases
        ],
        out_specs=[
            pl.BlockSpec((tile_n, 3 * d), lambda i: (i, 0)),     # fused representation
            pl.BlockSpec((tile_n, 3), lambda i: (i, 0)),         # softmax att (last_att)
        ],
    )

    io_bytes = jnp.dtype(io_dtype).itemsize
    mxu_bytes = jnp.dtype(mxu_dtype).itemsize
    cost = pl.CostEstimate(
        flops=n_pad * (2 * 3 * d * h + 8 * 3 * h + 16 * 3 * d),
        transcendentals=3 * n_pad,
        bytes_accessed=(2 * n_pad * 3 * d * io_bytes + 2 * n_pad * 3 * 4
                        + 3 * d * h * mxu_bytes + 4 * (6 * h + 3 + 2)),
    )

    fused, att = pl.pallas_call(
        kernel,
        out_shape=(jax.ShapeDtypeStruct((n_pad, 3 * d), io_dtype),
                   jax.ShapeDtypeStruct((n_pad, 3), jnp.float32)),
        grid_spec=grid_spec,
        compiler_params=pltpu.CompilerParams(
            dimension_semantics=("parallel",),   # independent row tiles
            # Explicit limit: v5e's default scoped-VMEM is only 16 MiB.  32 MiB is
            # safe on v5e/v6e (128 MiB physical) and v7x (64 MiB physical) and
            # covers the 12 MiB streamed-tile budget + weights with headroom.
            vmem_limit_bytes=32 * 1024 * 1024,
        ),
        cost_estimate=cost,
    )(wscale, x, theta_f, w1_stack, b1_stack, w2_stack, b2_cat)

    return fused[:n], att[:n]


def _reference(a, b, c, theta, params, w1_scalar, w2_scalar, *,
               mxu_dtype=jnp.bfloat16):
    """Plain-XLA reference mirroring the kernel's precision policy (mxu_dtype
    fc1 inputs / f32 accumulation, pure-f32 fc2 + softmax).  Mathematically
    identical to the torch module's forward."""
    def weco(x, w1, b1, w2, b2):
        hh = jnp.dot(x.astype(mxu_dtype), w1.astype(mxu_dtype),
                     preferred_element_type=jnp.float32) + b1
        hh = jnp.where(hh > 0, hh, LEAKY_SLOPE * hh)
        return jnp.sum(hh * w2[:, 0][None, :], axis=1, keepdims=True) + b2

    att_a = weco(a, params["w1a"], params["b1a"], params["w2a"], params["b2a"])
    att_b = weco(b, params["w1b"], params["b1b"], params["w2b"], params["b2b"])
    att_c = weco(c, params["w1c"], params["b1c"], params["w2c"], params["b2c"])
    f_att = jnp.concatenate([att_a, att_b, att_c], axis=1)
    logits = w1_scalar * f_att + w2_scalar * theta
    att = jax.nn.softmax(logits, axis=1)
    fused = jnp.concatenate(
        [att[:, 0:1] * a, att[:, 1:2] * b, att[:, 2:3] * c], axis=1)
    return fused, att


if __name__ == "__main__":
    # Small shapes consistent with the module: n_users rows, input_dim features.
    N, D, H = 16, 32, 16          # n_users, input_dim, hidden_dim
    W1_INIT = 0.5                 # module w1; w2 = 1 - w1
    W2_INIT = 1.0 - W1_INIT

    key = jax.random.PRNGKey(0)
    keys = jax.random.split(key, 16)

    def linear(kw, kb, fan_in, fan_out):
        # deterministic synthetic (in, out)-layout init standing in for torch defaults
        w = jax.random.normal(kw, (fan_in, fan_out), jnp.float32) / jnp.sqrt(fan_in)
        bias = jax.random.normal(kb, (1, fan_out), jnp.float32) * 0.01
        return w, bias

    w1a, b1a = linear(keys[0], keys[1], D, H)
    w2a, b2a = linear(keys[2], keys[3], H, 1)
    w1b, b1b = linear(keys[4], keys[5], D, H)
    w2b, b2b = linear(keys[6], keys[7], H, 1)
    w1c, b1c = linear(keys[8], keys[9], D, H)
    w2c, b2c = linear(keys[10], keys[11], H, 1)

    # theta: xavier_normal_ over (n_users, 3) -> std = sqrt(2 / (n_users + 3))
    theta = jax.random.normal(keys[12], (N, 3), jnp.float32) * jnp.sqrt(2.0 / (N + 3))
    a = jax.random.normal(keys[13], (N, D), jnp.float32)
    b = jax.random.normal(keys[14], (N, D), jnp.float32)
    c = jax.random.normal(keys[15], (N, D), jnp.float32)

    params = dict(
        w1a=w1a, b1a=b1a, w2a=w2a, b2a=b2a,
        w1b=w1b, b1b=b1b, w2b=w2b, b2b=b2b,
        w1c=w1c, b1c=b1c, w2c=w2c, b2c=b2c,
    )

    fused, att = pwc_forward(a, b, c, theta, params, W1_INIT, W2_INIT)
    fused, att = jax.block_until_ready((fused, att))

    ref_fused, ref_att = _reference(a, b, c, theta, params, W1_INIT, W2_INIT)

    assert fused.shape == (N, 3 * D) and att.shape == (N, 3)
    # Exact reciprocal + identical fc1 precision policy -> tight match.
    assert jnp.allclose(att, ref_att, atol=1e-4, rtol=1e-4), "att mismatch"
    assert jnp.allclose(fused, ref_fused, atol=1e-4, rtol=1e-4), "fused mismatch"
    # Attention rows must sum to 1 (fixed vs. the previous approx reciprocal).
    assert jnp.allclose(att.sum(axis=1), 1.0, atol=1e-5), "softmax not normalized"

    # TODO(synk): `self.last_att = _att2` / `update_w()` are stateful module-side
    # bookkeeping: the kernel exposes `att` as a second output for the caller to
    # stash, and the mixing scalars are fed via SMEM so per-epoch updates need no
    # recompile — the state mutation itself stays on the host.
    print("KERNEL_OK")
</pallas_src>

<mosaic_0001>
module attributes {stable_mosaic.version = 11 : i64} {
  func.func @pwc_kernel(%arg0: i32, %arg1: memref<2xf32, #tpu.memory_space<smem>>, %arg2: memref<8x96xf32, #tpu.memory_space<vmem>>, %arg3: memref<8x3xf32, #tpu.memory_space<vmem>>, %arg4: memref<3x32x16xbf16, #tpu.memory_space<vmem>>, %arg5: memref<3x1x16xf32, #tpu.memory_space<vmem>>, %arg6: memref<3x1x16xf32, #tpu.memory_space<vmem>>, %arg7: memref<1x3xf32, #tpu.memory_space<vmem>>, %arg8: memref<8x96xf32, #tpu.memory_space<vmem>>, %arg9: memref<8x3xf32, #tpu.memory_space<vmem>>) attributes {dimension_semantics = [#tpu.dimension_semantics<parallel>], iteration_bounds = array<i64: 2>, scalar_prefetch = 0 : i64, scratch_operands = 0 : i64, tpu.core_type = #tpu.core_type<tc>, window_params = [{transform_indices = @transform_0, window_bounds = array<i64: 2>}, {transform_indices = @transform_1, window_bounds = array<i64: 8, 96>}, {transform_indices = @transform_2, window_bounds = array<i64: 8, 3>}, {pipeline_mode = #tpu.pipeline_mode<synchronous>, transform_indices = @transform_3, window_bounds = array<i64: 3, 32, 16>}, {pipeline_mode = #tpu.pipeline_mode<synchronous>, transform_indices = @transform_4, window_bounds = array<i64: 3, 1, 16>}, {pipeline_mode = #tpu.pipeline_mode<synchronous>, transform_indices = @transform_5, window_bounds = array<i64: 3, 1, 16>}, {pipeline_mode = #tpu.pipeline_mode<synchronous>, transform_indices = @transform_6, window_bounds = array<i64: 1, 3>}, {transform_indices = @transform_7, window_bounds = array<i64: 8, 96>}, {transform_indices = @transform_8, window_bounds = array<i64: 8, 3>}]} {
    %c0 = arith.constant 0 : index
    %0 = memref.load %arg1[%c0] : memref<2xf32, #tpu.memory_space<smem>>
    %c1 = arith.constant 1 : index
    %1 = memref.load %arg1[%c1] : memref<2xf32, #tpu.memory_space<smem>>
    %c0_0 = arith.constant 0 : index
    %c0_1 = arith.constant 0 : index
    %2 = vector.load %arg2[%c0_0, %c0_1] : memref<8x96xf32, #tpu.memory_space<vmem>>, vector<8x32xf32>
    %3 = arith.truncf %2 : vector<8x32xf32> to vector<8x32xbf16>
    %c0_2 = arith.constant 0 : index
    %c0_3 = arith.constant 0 : index
    %c0_4 = arith.constant 0 : index
    %4 = vector.load %arg4[%c0_2, %c0_3, %c0_4] : memref<3x32x16xbf16, #tpu.memory_space<vmem>>, vector<1x32x16xbf16>
    %5 = vector.shape_cast %4 : vector<1x32x16xbf16> to vector<32x16xbf16>
    %cst = arith.constant dense<0.000000e+00> : vector<8x16xf32>
    %6 = tpu.matmul %3, %5, %cst {dimension_numbers = #tpu.dot_dimension_numbers<[1], [0], [0], [1], [0, 0, 1, 1], [], []>} : vector<8x32xbf16>, vector<32x16xbf16>, vector<8x16xf32> -> vector<8x16xf32>
    %c0_5 = arith.constant 0 : index
    %c0_6 = arith.constant 0 : index
    %c0_7 = arith.constant 0 : index
    %7 = vector.load %arg5[%c0_5, %c0_6, %c0_7] : memref<3x1x16xf32, #tpu.memory_space<vmem>>, vector<1x1x16xf32>
    %8 = vector.shape_cast %7 : vector<1x1x16xf32> to vector<1x16xf32>
    %9 = vector.broadcast %8 : vector<1x16xf32> to vector<8x16xf32>
    %10 = arith.addf %6, %9 : vector<8x16xf32>
    %cst_8 = arith.constant 0.000000e+00 : f32
    %11 = vector.broadcast %cst_8 : f32 to vector<8x16xf32>
    %12 = arith.cmpf ogt, %10, %11 : vector<8x16xf32>
    %cst_9 = arith.constant 0.00999999977 : f32
    %13 = vector.broadcast %cst_9 : f32 to vector<8x16xf32>
    %14 = arith.mulf %13, %10 : vector<8x16xf32>
    %15 = arith.select %12, %10, %14 : vector<8x16xi1>, vector<8x16xf32>
    %c0_10 = arith.constant 0 : index
    %c0_11 = arith.constant 0 : index
    %c0_12 = arith.constant 0 : index
    %16 = vector.load %arg6[%c0_10, %c0_11, %c0_12] : memref<3x1x16xf32, #tpu.memory_space<vmem>>, vector<1x1x16xf32>
    %17 = vector.shape_cast %16 : vector<1x1x16xf32> to vector<1x16xf32>
    %18 = vector.broadcast %17 : vector<1x16xf32> to vector<8x16xf32>
    %19 = arith.mulf %15, %18 : vector<8x16xf32>
    %cst_13 = arith.constant dense<0.000000e+00> : vector<8xf32>
    %20 = vector.multi_reduction <add>, %19, %cst_13 [1] : vector<8x16xf32> to vector<8xf32>
    %21 = vector.shape_cast %20 : vector<8xf32> to vector<8x1xf32>
    %c0_14 = arith.constant 0 : index
    %c0_15 = arith.constant 0 : index
    %22 = vector.load %arg7[%c0_14, %c0_15] : memref<1x3xf32, #tpu.memory_space<vmem>>, vector<1x1xf32>
    %23 = vector.broadcast %22 : vector<1x1xf32> to vector<8x1xf32>
    %24 = arith.addf %21, %23 : vector<8x1xf32>
    %25 = vector.broadcast %0 : f32 to vector<8x1xf32>
    %26 = arith.mulf %25, %24 : vector<8x1xf32>
    %c0_16 = arith.constant 0 : index
    %c0_17 = arith.constant 0 : index
    %27 = vector.load %arg3[%c0_16, %c0_17] : memref<8x3xf32, #tpu.memory_space<vmem>>, vector<8x1xf32>
    %28 = vector.broadcast %1 : f32 to vector<8x1xf32>
    %29 = arith.mulf %28, %27 : vector<8x1xf32>
    %30 = arith.addf %26, %29 : vector<8x1xf32>
    %c0_18 = arith.constant 0 : index
    %c32 = arith.constant 32 : index
    %31 = vector.load %arg2[%c0_18, %c32] : memref<8x96xf32, #tpu.memory_space<vmem>>, vector<8x32xf32>
    %32 = arith.truncf %31 : vector<8x32xf32> to vector<8x32xbf16>
    %c1_19 = arith.constant 1 : index
    %c0_20 = arith.constant 0 : index
    %c0_21 = arith.constant 0 : index
    %33 = vector.load %arg4[%c1_19, %c0_20, %c0_21] : memref<3x32x16xbf16, #tpu.memory_space<vmem>>, vector<1x32x16xbf16>
    %34 = vector.shape_cast %33 : vector<1x32x16xbf16> to vector<32x16xbf16>
    %cst_22 = arith.constant dense<0.000000e+00> : vector<8x16xf32>
    %35 = tpu.matmul %32, %34, %cst_22 {dimension_numbers = #tpu.dot_dimension_numbers<[1], [0], [0], [1], [0, 0, 1, 1], [], []>} : vector<8x32xbf16>, vector<32x16xbf16>, vector<8x16xf32> -> vector<8x16xf32>
    %c1_23 = arith.constant 1 : index
    %c0_24 = arith.constant 0 : index
    %c0_25 = arith.constant 0 : index
    %36 = vector.load %arg5[%c1_23, %c0_24, %c0_25] : memref<3x1x16xf32, #tpu.memory_space<vmem>>, vector<1x1x16xf32>
    %37 = vector.shape_cast %36 : vector<1x1x16xf32> to vector<1x16xf32>
    %38 = vector.broadcast %37 : vector<1x16xf32> to vector<8x16xf32>
    %39 = arith.addf %35, %38 : vector<8x16xf32>
    %cst_26 = arith.constant 0.000000e+00 : f32
    %40 = vector.broadcast %cst_26 : f32 to vector<8x16xf32>
    %41 = arith.cmpf ogt, %39, %40 : vector<8x16xf32>
    %cst_27 = arith.constant 0.00999999977 : f32
    %42 = vector.broadcast %cst_27 : f32 to vector<8x16xf32>
    %43 = arith.mulf %42, %39 : vector<8x16xf32>
    %44 = arith.select %41, %39, %43 : vector<8x16xi1>, vector<8x16xf32>
    %c1_28 = arith.constant 1 : index
    %c0_29 = arith.constant 0 : index
    %c0_30 = arith.constant 0 : index
    %45 = vector.load %arg6[%c1_28, %c0_29, %c0_30] : memref<3x1x16xf32, #tpu.memory_space<vmem>>, vector<1x1x16xf32>
    %46 = vector.shape_cast %45 : vector<1x1x16xf32> to vector<1x16xf32>
    %47 = vector.broadcast %46 : vector<1x16xf32> to vector<8x16xf32>
    %48 = arith.mulf %44, %47 : vector<8x16xf32>
    %cst_31 = arith.constant dense<0.000000e+00> : vector<8xf32>
    %49 = vector.multi_reduction <add>, %48, %cst_31 [1] : vector<8x16xf32> to vector<8xf32>
    %50 = vector.shape_cast %49 : vector<8xf32> to vector<8x1xf32>
    %c0_32 = arith.constant 0 : index
    %c1_33 = arith.constant 1 : index
    %51 = vector.load %arg7[%c0_32, %c1_33] : memref<1x3xf32, #tpu.memory_space<vmem>>, vector<1x1xf32>
    %52 = vector.broadcast %51 : vector<1x1xf32> to vector<8x1xf32>
    %53 = arith.addf %50, %52 : vector<8x1xf32>
    %54 = vector.broadcast %0 : f32 to vector<8x1xf32>
    %55 = arith.mulf %54, %53 : vector<8x1xf32>
    %c0_34 = arith.constant 0 : index
    %c1_35 = arith.constant 1 : index
    %56 = vector.load %arg3[%c0_34, %c1_35] : memref<8x3xf32, #tpu.memory_space<vmem>>, vector<8x1xf32>
    %57 = vector.broadcast %1 : f32 to vector<8x1xf32>
    %58 = arith.mulf %57, %56 : vector<8x1xf32>
    %59 = arith.addf %55, %58 : vector<8x1xf32>
    %c0_36 = arith.constant 0 : index
    %c64 = arith.constant 64 : index
    %60 = vector.load %arg2[%c0_36, %c64] : memref<8x96xf32, #tpu.memory_space<vmem>>, vector<8x32xf32>
    %61 = arith.truncf %60 : vector<8x32xf32> to vector<8x32xbf16>
    %c2 = arith.constant 2 : index
    %c0_37 = arith.constant 0 : index
    %c0_38 = arith.constant 0 : index
    %62 = vector.load %arg4[%c2, %c0_37, %c0_38] : memref<3x32x16xbf16, #tpu.memory_space<vmem>>, vector<1x32x16xbf16>
    %63 = vector.shape_cast %62 : vector<1x32x16xbf16> to vector<32x16xbf16>
    %cst_39 = arith.constant dense<0.000000e+00> : vector<8x16xf32>
    %64 = tpu.matmul %61, %63, %cst_39 {dimension_numbers = #tpu.dot_dimension_numbers<[1], [0], [0], [1], [0, 0, 1, 1], [], []>} : vector<8x32xbf16>, vector<32x16xbf16>, vector<8x16xf32> -> vector<8x16xf32>
    %c2_40 = arith.constant 2 : index
    %c0_41 = arith.constant 0 : index
    %c0_42 = arith.constant 0 : index
    %65 = vector.load %arg5[%c2_40, %c0_41, %c0_42] : memref<3x1x16xf32, #tpu.memory_space<vmem>>, vector<1x1x16xf32>
    %66 = vector.shape_cast %65 : vector<1x1x16xf32> to vector<1x16xf32>
    %67 = vector.broadcast %66 : vector<1x16xf32> to vector<8x16xf32>
    %68 = arith.addf %64, %67 : vector<8x16xf32>
    %cst_43 = arith.constant 0.000000e+00 : f32
    %69 = vector.broadcast %cst_43 : f32 to vector<8x16xf32>
    %70 = arith.cmpf ogt, %68, %69 : vector<8x16xf32>
    %cst_44 = arith.constant 0.00999999977 : f32
    %71 = vector.broadcast %cst_44 : f32 to vector<8x16xf32>
    %72 = arith.mulf %71, %68 : vector<8x16xf32>
    %73 = arith.select %70, %68, %72 : vector<8x16xi1>, vector<8x16xf32>
    %c2_45 = arith.constant 2 : index
    %c0_46 = arith.constant 0 : index
    %c0_47 = arith.constant 0 : index
    %74 = vector.load %arg6[%c2_45, %c0_46, %c0_47] : memref<3x1x16xf32, #tpu.memory_space<vmem>>, vector<1x1x16xf32>
    %75 = vector.shape_cast %74 : vector<1x1x16xf32> to vector<1x16xf32>
    %76 = vector.broadcast %75 : vector<1x16xf32> to vector<8x16xf32>
    %77 = arith.mulf %73, %76 : vector<8x16xf32>
    %cst_48 = arith.constant dense<0.000000e+00> : vector<8xf32>
    %78 = vector.multi_reduction <add>, %77, %cst_48 [1] : vector<8x16xf32> to vector<8xf32>
    %79 = vector.shape_cast %78 : vector<8xf32> to vector<8x1xf32>
    %c0_49 = arith.constant 0 : index
    %c2_50 = arith.constant 2 : index
    %80 = vector.load %arg7[%c0_49, %c2_50] : memref<1x3xf32, #tpu.memory_space<vmem>>, vector<1x1xf32>
    %81 = vector.broadcast %80 : vector<1x1xf32> to vector<8x1xf32>
    %82 = arith.addf %79, %81 : vector<8x1xf32>
    %83 = vector.broadcast %0 : f32 to vector<8x1xf32>
    %84 = arith.mulf %83, %82 : vector<8x1xf32>
    %c0_51 = arith.constant 0 : index
    %c2_52 = arith.constant 2 : index
    %85 = vector.load %arg3[%c0_51, %c2_52] : memref<8x3xf32, #tpu.memory_space<vmem>>, vector<8x1xf32>
    %86 = vector.broadcast %1 : f32 to vector<8x1xf32>
    %87 = arith.mulf %86, %85 : vector<8x1xf32>
    %88 = arith.addf %84, %87 : vector<8x1xf32>
    %89 = arith.maximumf %30, %59 : vector<8x1xf32>
    %90 = arith.maximumf %89, %88 : vector<8x1xf32>
    %91 = arith.subf %30, %90 : vector<8x1xf32>
    %92 = math.exp %91 : vector<8x1xf32>
    %93 = arith.subf %59, %90 : vector<8x1xf32>
    %94 = math.exp %93 : vector<8x1xf32>
    %95 = arith.subf %88, %90 : vector<8x1xf32>
    %96 = math.exp %95 : vector<8x1xf32>
    %97 = arith.addf %92, %94 : vector<8x1xf32>
    %98 = arith.addf %97, %96 : vector<8x1xf32>
    %cst_53 = arith.constant 1.000000e+00 : f32
    %99 = vector.broadcast %cst_53 : f32 to vector<8x1xf32>
    %100 = arith.divf %99, %98 : vector<8x1xf32>
    %101 = arith.mulf %92, %100 : vector<8x1xf32>
    %102 = arith.mulf %94, %100 : vector<8x1xf32>
    %103 = arith.mulf %96, %100 : vector<8x1xf32>
    %104 = tpu.concatenate %101, %102, %103 in 1 : vector<8x1xf32>, vector<8x1xf32>, vector<8x1xf32> -> vector<8x3xf32>
    %c0_54 = arith.constant 0 : index
    %c0_55 = arith.constant 0 : index
    %105 = vector.load %arg9[%c0_54, %c0_55] : memref<8x3xf32, #tpu.memory_space<vmem>>, vector<8x3xf32>
    tpu.vector_store %arg9[%c0_54, %c0_55], %104 {strides = array<i32>} : memref<8x3xf32, #tpu.memory_space<vmem>>, vector<8x3xf32>,
    %106 = tpu.iota {dimensions = array<i32: 1>} : vector<8x96xi32>
    %c32_i32 = arith.constant 32 : i32
    %107 = vector.broadcast %c32_i32 : i32 to vector<8x96xi32>
    %108 = arith.cmpi slt, %106, %107 : vector<8x96xi32>
    %109 = vector.shape_cast %101 : vector<8x1xf32> to vector<8x1xf32>
    %110 = vector.broadcast %109 : vector<8x1xf32> to vector<8x96xf32>
    %c64_i32 = arith.constant 64 : i32
    %111 = vector.broadcast %c64_i32 : i32 to vector<8x96xi32>
    %112 = arith.cmpi slt, %106, %111 : vector<8x96xi32>
    %113 = vector.shape_cast %102 : vector<8x1xf32> to vector<8x1xf32>
    %114 = vector.broadcast %113 : vector<8x1xf32> to vector<8x96xf32>
    %115 = vector.shape_cast %103 : vector<8x1xf32> to vector<8x1xf32>
    %116 = vector.broadcast %115 : vector<8x1xf32> to vector<8x96xf32>
    %117 = arith.select %112, %114, %116 : vector<8x96xi1>, vector<8x96xf32>
    %118 = arith.select %108, %110, %117 : vector<8x96xi1>, vector<8x96xf32>
    %c0_56 = arith.constant 0 : index
    %c0_57 = arith.constant 0 : index
    %119 = vector.load %arg2[%c0_56, %c0_57] : memref<8x96xf32, #tpu.memory_space<vmem>>, vector<8x96xf32>
    %120 = arith.mulf %118, %119 : vector<8x96xf32>
    %c0_58 = arith.constant 0 : index
    %c0_59 = arith.constant 0 : index
    %121 = vector.load %arg8[%c0_58, %c0_59] : memref<8x96xf32, #tpu.memory_space<vmem>>, vector<8x96xf32>
    tpu.vector_store %arg8[%c0_58, %c0_59], %120 {strides = array<i32>} : memref<8x96xf32, #tpu.memory_space<vmem>>, vector<8x96xf32>,
    return
  }
  func.func @transform_0(%arg0: i32) -> i32 {
    %c0_i32 = arith.constant 0 : i32
    %c0_i32_0 = arith.constant 0 : i32
    return %c0_i32 : i32
  }
  func.func @transform_1(%arg0: i32) -> (i32, i32) {
    %c0_i32 = arith.constant 0 : i32
    %c0_i32_0 = arith.constant 0 : i32
    return %arg0, %c0_i32 : i32, i32
  }
  func.func @transform_2(%arg0: i32) -> (i32, i32) {
    %c0_i32 = arith.constant 0 : i32
    %c0_i32_0 = arith.constant 0 : i32
    return %arg0, %c0_i32 : i32, i32
  }
  func.func @transform_3(%arg0: i32) -> (i32, i32, i32) {
    %c0_i32 = arith.constant 0 : i32
    %c0_i32_0 = arith.constant 0 : i32
    %c0_i32_1 = arith.constant 0 : i32
    %c0_i32_2 = arith.constant 0 : i32
    return %c0_i32, %c0_i32_0, %c0_i32_1 : i32, i32, i32
  }
  func.func @transform_4(%arg0: i32) -> (i32, i32, i32) {
    %c0_i32 = arith.constant 0 : i32
    %c0_i32_0 = arith.constant 0 : i32
    %c0_i32_1 = arith.constant 0 : i32
    %c0_i32_2 = arith.constant 0 : i32
    return %c0_i32, %c0_i32_0, %c0_i32_1 : i32, i32, i32
  }
  func.func @transform_5(%arg0: i32) -> (i32, i32, i32) {
    %c0_i32 = arith.constant 0 : i32
    %c0_i32_0 = arith.constant 0 : i32
    %c0_i32_1 = arith.constant 0 : i32
    %c0_i32_2 = arith.constant 0 : i32
    return %c0_i32, %c0_i32_0, %c0_i32_1 : i32, i32, i32
  }
  func.func @transform_6(%arg0: i32) -> (i32, i32) {
    %c0_i32 = arith.constant 0 : i32
    %c0_i32_0 = arith.constant 0 : i32
    %c0_i32_1 = arith.constant 0 : i32
    return %c0_i32, %c0_i32_0 : i32, i32
  }
  func.func @transform_7(%arg0: i32) -> (i32, i32) {
    %c0_i32 = arith.constant 0 : i32
    %c0_i32_0 = arith.constant 0 : i32
    return %arg0, %c0_i32 : i32, i32
  }
  func.func @transform_8(%arg0: i32) -> (i32, i32) {
    %c0_i32 = arith.constant 0 : i32
    %c0_i32_0 = arith.constant 0 : i32
    return %arg0, %c0_i32 : i32, i32
  }
}

</mosaic_0001>

<llo_original>
// kernel: tpu_custom_call.1
$region0: #{tpu_custom_call.1}
  #allocation0 [shape = 'u32[]', space=smem, size = 0x4, offset = 0x4, fixed_abs, tag = 'smem constant byte address 0x4 - core index']
  #allocation1 [shape = 'u32[144,128]{1,0:T(1,128)}', space=vmem, size = 0x12000, scoped, tag = 'internal scratch']
  %s0 = inlined_call_operand.vmem [shape: f32[2], index: 0, kind: input, shape index: {}]
  %s1 = inlined_call_operand.vmem [shape: f32[16,96], index: 1, kind: input, shape index: {}]
  %s2 = inlined_call_operand.vmem [shape: f32[16,3], index: 2, kind: input, shape index: {}]
  %s3 = inlined_call_operand.vmem [shape: bf16[3,32,16], index: 3, kind: input, shape index: {}]
  %s4 = inlined_call_operand.vmem [shape: f32[3,1,16], index: 4, kind: input, shape index: {}]
  %s5 = inlined_call_operand.vmem [shape: f32[3,1,16], index: 5, kind: input, shape index: {}]
  %s6 = inlined_call_operand.vmem [shape: f32[1,3], index: 6, kind: input, shape index: {}]
  %s7 = inlined_call_operand.hbm [shape: f32[16,96], index: 7, kind: output, shape index: {0}]
  %s8 = inlined_call_operand.vmem [shape: f32[16,3], index: 8, kind: output, shape index: {1}]
  %9 = xla_tuple %s7, %s8
  %s10 = sld [smem:[#allocation0]]
  $region73: #{tpu_custom_call.1} parent=0
    _
  %s12 = ssub.s32 1, %s10
  %s13 = scalar_select 0, %s12, %s10
  $region1: #{tpu_custom_call.1} parent=0
    #allocation2 [shape = 'u8[512]{0}', space=smem, size = 0x200, scoped, tag = 'input window, operand 0, single buffered']
    #allocation3 [shape = 's32[2]{0}', space=sflag, size = 0x8, scoped, tag = 'scoped memory for tpu_custom_call.1']
    #allocation4 [shape = 's32[2]{0}', space=sflag, size = 0x8, scoped, tag = 'scoped memory for tpu_custom_call.1']
    #allocation5 [shape = 'u8[8192]{0}', space=vmem, size = 0x2000, scoped, tag = 'output window, operand 0']
    %14 = vsyncpa [#allocation4], 0
    %15 = vsyncpa [#allocation3], 0
    %s16 = scalar_lea.sflag [#allocation3], 1
    %17 = vsyncpa %s16, 0
    loop: start=0, step=1, limit=4
    $region2: #{tpu_custom_call.1} parent=1 // loop_pre_header
      _
    $region3: #{tpu_custom_call.1} parent=1 // loop_header
      %s19 = sphi 0, %s23
      %p20 = scmp.ge.s32.totalorder %s19, 4
      %s27 = sphi 0, %s27
      %s29 = sphi 0, %s27
      %s30 = sphi 0, %s29
      %s44 = sphi 0, %s30
      %s50 = sphi 0, %s52
      %s53 = sphi 0, %s50
      %s54 = sphi 0, %s53
      %s70 = sphi 0, %s54
      %s76 = sphi 0, %s78
      %s79 = sphi 0, %s76
      %s80 = sphi 0, %s79
      %s96 = sphi 0, %s80
      %s100 = sphi 0, %s100
      %s102 = sphi 0, %s100
      %s103 = sphi 0, %s102
      %s117 = sphi 0, %s103
      %s121 = sphi 0, %s121
      %s123 = sphi 0, %s121
      %s124 = sphi 0, %s123
      %s138 = sphi 0, %s124
      %s142 = sphi 0, %s142
      %s144 = sphi 0, %s142
      %s145 = sphi 0, %s144
      %s159 = sphi 0, %s145
      %s163 = sphi 0, %s163
      %s165 = sphi 0, %s163
      %s166 = sphi 0, %s165
      %s180 = sphi 0, %s166
      %s186 = sphi 0, %s188
      %s189 = sphi 0, %s186
      %s190 = sphi 0, %s189
      %s206 = sphi 0, %s190
      %s212 = sphi 0, %s214
      %s215 = sphi 0, %s212
      %s216 = sphi 0, %s215
      %s232 = sphi 0, %s216
    $region4: #{tpu_custom_call.1} parent=1 // loop_header_branch
      %22 = sbr.rel (%p20) target = $region8
    $region5: #{tpu_custom_call.1} parent=1 // loop_body
      %s24 = ssub.s32 %s19, 1
      %s25 = ssub.s32 %s19, 2
      %s26 = sadd.s32 %s19, 1
      %s28 = sadd.s32 %s27, 1
      %p31 = scmp.eq.s32.totalorder %s19, 1
      %p32 = scmp.ne.s32.totalorder %s27, %s29
      %p33 = scmp.eq.s32.totalorder %s19, 0
      %p34 = por %p32, %p33
      %p35 = scmp.ne.s32.totalorder %s27, %s29
      %p36 = scmp.eq.s32.totalorder %s24, 1
      %p37 = por %p35, %p36
      %p38 = scmp.ne.s32.totalorder %s29, %s30
      %p39 = scmp.eq.s32.totalorder %s24, 0
      %p40 = por %p38, %p39
      %p41 = scmp.ne.s32.totalorder %s29, %s30
      %p42 = scmp.eq.s32.totalorder %s25, 1
      %p43 = por %p41, %p42
      %p45 = scmp.ne.s32.totalorder %s30, %s44
      %p46 = scmp.eq.s32.totalorder %s25, 0
      %p47 = por %p45, %p46
      %s48 = ssub.s32 %s19, %s26
      %p49 = scmp.eq.s32.totalorder %s48, 0
      %s51 = sadd.s32 %s50, 1
      %s52 = scalar_select %p49, %s50, %s51
      %p55 = pneg %p49
      %p56 = scmp.eq.s32.totalorder %s19, 1
      %p57 = por %p55, %p56
      %p58 = scmp.ne.s32.totalorder %s50, %s53
      %p59 = scmp.eq.s32.totalorder %s19, 0
      %p60 = por %p58, %p59
      %p61 = scmp.ne.s32.totalorder %s50, %s53
      %p62 = scmp.eq.s32.totalorder %s24, 1
      %p63 = por %p61, %p62
      %p64 = scmp.ne.s32.totalorder %s53, %s54
      %p65 = scmp.eq.s32.totalorder %s24, 0
      %p66 = por %p64, %p65
      %p67 = scmp.ne.s32.totalorder %s53, %s54
      %p68 = scmp.eq.s32.totalorder %s25, 1
      %p69 = por %p67, %p68
      %p71 = scmp.ne.s32.totalorder %s54, %s70
      %p72 = scmp.eq.s32.totalorder %s25, 0
      %p73 = por %p71, %p72
      %s74 = ssub.s32 %s19, %s26
      %p75 = scmp.eq.s32.totalorder %s74, 0
      %s77 = sadd.s32 %s76, 1
      %s78 = scalar_select %p75, %s76, %s77
      %p81 = pneg %p75
      %p82 = scmp.eq.s32.totalorder %s19, 1
      %p83 = por %p81, %p82
      %p84 = scmp.ne.s32.totalorder %s76, %s79
      %p85 = scmp.eq.s32.totalorder %s19, 0
      %p86 = por %p84, %p85
      %p87 = scmp.ne.s32.totalorder %s76, %s79
      %p88 = scmp.eq.s32.totalorder %s24, 1
      %p89 = por %p87, %p88
      %p90 = scmp.ne.s32.totalorder %s79, %s80
      %p91 = scmp.eq.s32.totalorder %s24, 0
      %p92 = por %p90, %p91
      %p93 = scmp.ne.s32.totalorder %s79, %s80
      %p94 = scmp.eq.s32.totalorder %s25, 1
      %p95 = por %p93, %p94
      %p97 = scmp.ne.s32.totalorder %s80, %s96
      %p98 = scmp.eq.s32.totalorder %s25, 0
      %p99 = por %p97, %p98
      %s101 = sadd.s32 %s100, 1
      %p104 = scmp.eq.s32.totalorder %s19, 1
      %p105 = scmp.ne.s32.totalorder %s100, %s102
      %p106 = scmp.eq.s32.totalorder %s19, 0
      %p107 = por %p105, %p106
      %p108 = scmp.ne.s32.totalorder %s100, %s102
      %p109 = scmp.eq.s32.totalorder %s24, 1
      %p110 = por %p108, %p109
      %p111 = scmp.ne.s32.totalorder %s102, %s103
      %p112 = scmp.eq.s32.totalorder %s24, 0
      %p113 = por %p111, %p112
      %p114 = scmp.ne.s32.totalorder %s102, %s103
      %p115 = scmp.eq.s32.totalorder %s25, 1
      %p116 = por %p114, %p115
      %p118 = scmp.ne.s32.totalorder %s103, %s117
      %p119 = scmp.eq.s32.totalorder %s25, 0
      %p120 = por %p118, %p119
      %s122 = sadd.s32 %s121, 1
      %p125 = scmp.eq.s32.totalorder %s19, 1
      %p126 = scmp.ne.s32.totalorder %s121, %s123
      %p127 = scmp.eq.s32.totalorder %s19, 0
      %p128 = por %p126, %p127
      %p129 = scmp.ne.s32.totalorder %s121, %s123
      %p130 = scmp.eq.s32.totalorder %s24, 1
      %p131 = por %p129, %p130
      %p132 = scmp.ne.s32.totalorder %s123, %s124
      %p133 = scmp.eq.s32.totalorder %s24, 0
      %p134 = por %p132, %p133
      %p135 = scmp.ne.s32.totalorder %s123, %s124
      %p136 = scmp.eq.s32.totalorder %s25, 1
      %p137 = por %p135, %p136
      %p139 = scmp.ne.s32.totalorder %s124, %s138
      %p140 = scmp.eq.s32.totalorder %s25, 0
      %p141 = por %p139, %p140
      %s143 = sadd.s32 %s142, 1
      %p146 = scmp.eq.s32.totalorder %s19, 1
      %p147 = scmp.ne.s32.totalorder %s142, %s144
      %p148 = scmp.eq.s32.totalorder %s19, 0
      %p149 = por %p147, %p148
      %p150 = scmp.ne.s32.totalorder %s142, %s144
      %p151 = scmp.eq.s32.totalorder %s24, 1
      %p152 = por %p150, %p151
      %p153 = scmp.ne.s32.totalorder %s144, %s145
      %p154 = scmp.eq.s32.totalorder %s24, 0
      %p155 = por %p153, %p154
      %p156 = scmp.ne.s32.totalorder %s144, %s145
      %p157 = scmp.eq.s32.totalorder %s25, 1
      %p158 = por %p156, %p157
      %p160 = scmp.ne.s32.totalorder %s145, %s159
      %p161 = scmp.eq.s32.totalorder %s25, 0
      %p162 = por %p160, %p161
      %s164 = sadd.s32 %s163, 1
      %p167 = scmp.eq.s32.totalorder %s19, 1
      %p168 = scmp.ne.s32.totalorder %s163, %s165
      %p169 = scmp.eq.s32.totalorder %s19, 0
      %p170 = por %p168, %p169
      %p171 = scmp.ne.s32.totalorder %s163, %s165
      %p172 = scmp.eq.s32.totalorder %s24, 1
      %p173 = por %p171, %p172
      %p174 = scmp.ne.s32.totalorder %s165, %s166
      %p175 = scmp.eq.s32.totalorder %s24, 0
      %p176 = por %p174, %p175
      %p177 = scmp.ne.s32.totalorder %s165, %s166
      %p178 = scmp.eq.s32.totalorder %s25, 1
      %p179 = por %p177, %p178
      %p181 = scmp.ne.s32.totalorder %s166, %s180
      %p182 = scmp.eq.s32.totalorder %s25, 0
      %p183 = por %p181, %p182
      %s184 = ssub.s32 %s19, %s26
      %p185 = scmp.eq.s32.totalorder %s184, 0
      %s187 = sadd.s32 %s186, 1
      %s188 = scalar_select %p185, %s186, %s187
      %p191 = pneg %p185
      %p192 = scmp.eq.s32.totalorder %s19, 1
      %p193 = por %p191, %p192
      %p194 = scmp.ne.s32.totalorder %s186, %s189
      %p195 = scmp.eq.s32.totalorder %s19, 0
      %p196 = por %p194, %p195
      %p197 = scmp.ne.s32.totalorder %s186, %s189
      %p198 = scmp.eq.s32.totalorder %s24, 1
      %p199 = por %p197, %p198
      %p200 = scmp.ne.s32.totalorder %s189, %s190
      %p201 = scmp.eq.s32.totalorder %s24, 0
      %p202 = por %p200, %p201
      %p203 = scmp.ne.s32.totalorder %s189, %s190
      %p204 = scmp.eq.s32.totalorder %s25, 1
      %p205 = por %p203, %p204
      %p207 = scmp.ne.s32.totalorder %s190, %s206
      %p208 = scmp.eq.s32.totalorder %s25, 0
      %p209 = por %p207, %p208
      %s210 = ssub.s32 %s19, %s26
      %p211 = scmp.eq.s32.totalorder %s210, 0
      %s213 = sadd.s32 %s212, 1
      %s214 = scalar_select %p211, %s212, %s213
      %p217 = pneg %p211
      %p218 = scmp.eq.s32.totalorder %s19, 1
      %p219 = por %p217, %p218
      %p220 = scmp.ne.s32.totalorder %s212, %s215
      %p221 = scmp.eq.s32.totalorder %s19, 0
      %p222 = por %p220, %p221
      %p223 = scmp.ne.s32.totalorder %s212, %s215
      %p224 = scmp.eq.s32.totalorder %s24, 1
      %p225 = por %p223, %p224
      %p226 = scmp.ne.s32.totalorder %s215, %s216
      %p227 = scmp.eq.s32.totalorder %s24, 0
      %p228 = por %p226, %p227
      %p229 = scmp.ne.s32.totalorder %s215, %s216
      %p230 = scmp.eq.s32.totalorder %s25, 1
      %p231 = por %p229, %p230
      %p233 = scmp.ne.s32.totalorder %s216, %s232
      %p234 = scmp.eq.s32.totalorder %s25, 0
      %p235 = por %p233, %p234
      %p236 = scmp.le.s32.totalorder 1, %s19
      %p237 = scmp.lt.s32.totalorder %s19, 3
      %p238 = pnand %p236, %p237
      %p239 = pneg %p238
      // Predicated region
      $region9: #{tpu_custom_call.1} parent=5 // pred_check
        _
      $region10: #{tpu_custom_call.1} parent=5 // pred_check_branch
        %241 = sbr.rel (%p238) target = $region12
      $region11: #{tpu_custom_call.1} parent=5 // pred_region
        %s242 = ssub.s32 %s19, 1
        // Predicated region
        $region13: #{tpu_custom_call.1} parent=11 // pred_check
          %p243 = pneg %p40
        $region14: #{tpu_custom_call.1} parent=11 // pred_check_branch
          %245 = sbr.rel (%p243) target = $region16
        $region15: #{tpu_custom_call.1} parent=11 // pred_region
          %s247 = ssub.s32 16, 16
          %248 = vsyncadd [#allocation4], %s247
          %s250 = sshll.u32 %s0, 4
          %s251 = int_to_ptr.vmem [resolvable:$true] %s250
          %253 = dma.vmem_to_smem %s251, 16, [#allocation2], [#allocation4]
        $region16: #{tpu_custom_call.1} parent=11 // pred_fallthru
          _
        // Predicated region
        $region17: #{tpu_custom_call.1} parent=11 // pred_check
          %p254 = pneg %p113
        $region18: #{tpu_custom_call.1} parent=11 // pred_check_branch
          %256 = sbr.rel (%p254) target = $region20
        $region19: #{tpu_custom_call.1} parent=11 // pred_region
          _
        $region20: #{tpu_custom_call.1} parent=11 // pred_fallthru
          _
        // Predicated region
        $region21: #{tpu_custom_call.1} parent=11 // pred_check
          %p257 = pneg %p134
        $region22: #{tpu_custom_call.1} parent=11 // pred_check_branch
          %259 = sbr.rel (%p257) target = $region24
        $region23: #{tpu_custom_call.1} parent=11 // pred_region
          _
        $region24: #{tpu_custom_call.1} parent=11 // pred_fallthru
          _
        // Predicated region
        $region25: #{tpu_custom_call.1} parent=11 // pred_check
          %p260 = pneg %p155
        $region26: #{tpu_custom_call.1} parent=11 // pred_check_branch
          %262 = sbr.rel (%p260) target = $region28
        $region27: #{tpu_custom_call.1} parent=11 // pred_region
          _
        $region28: #{tpu_custom_call.1} parent=11 // pred_fallthru
          _
        // Predicated region
        $region29: #{tpu_custom_call.1} parent=11 // pred_check
          %p263 = pneg %p176
        $region30: #{tpu_custom_call.1} parent=11 // pred_check_branch
          %265 = sbr.rel (%p263) target = $region32
        $region31: #{tpu_custom_call.1} parent=11 // pred_region
          _
        $region32: #{tpu_custom_call.1} parent=11 // pred_fallthru
          _
      $region12: #{tpu_custom_call.1} parent=5 // pred_fallthru
        _
      %p266 = scmp.lt.s32.totalorder %s19, 2
      // Predicated region
      $region33: #{tpu_custom_call.1} parent=5 // pred_check
        %p267 = pneg %p266
      $region34: #{tpu_custom_call.1} parent=5 // pred_check_branch
        %269 = sbr.rel (%p267) target = $region36
      $region35: #{tpu_custom_call.1} parent=5 // pred_region
        // Predicated region
        $region37: #{tpu_custom_call.1} parent=35 // pred_check
          %p270 = pneg %p60
        $region38: #{tpu_custom_call.1} parent=35 // pred_check_branch
          %272 = sbr.rel (%p270) target = $region40
        $region39: #{tpu_custom_call.1} parent=35 // pred_region
          %p273 = scmp.lt.s32.totalorder %s19, 1
          %s274 = scalar_select %p273, %s19, 1
          %s275 = smul.addr %s274, 8
          %s276 = scalar_lea.vmem %s1, %s275
        $region40: #{tpu_custom_call.1} parent=35 // pred_fallthru
          _
        // Predicated region
        $region41: #{tpu_custom_call.1} parent=35 // pred_check
          %p277 = pneg %p86
        $region42: #{tpu_custom_call.1} parent=35 // pred_check_branch
          %279 = sbr.rel (%p277) target = $region44
        $region43: #{tpu_custom_call.1} parent=35 // pred_region
          %p280 = scmp.lt.s32.totalorder %s19, 1
          %s281 = scalar_select %p280, %s19, 1
          %s282 = smul.addr %s281, 8
          %s283 = scalar_lea.vmem %s2, %s282
        $region44: #{tpu_custom_call.1} parent=35 // pred_fallthru
          _
      $region36: #{tpu_custom_call.1} parent=5 // pred_fallthru
        _
      %p284 = scmp.le.s32.totalorder 1, %s19
      %p285 = scmp.lt.s32.totalorder %s19, 3
      %p286 = pnand %p284, %p285
      %p287 = pneg %p286
      // Predicated region
      $region45: #{tpu_custom_call.1} parent=5 // pred_check
        _
      $region46: #{tpu_custom_call.1} parent=5 // pred_check_branch
        %289 = sbr.rel (%p286) target = $region48
      $region47: #{tpu_custom_call.1} parent=5 // pred_region
        %s290 = ssub.s32 %s19, 1
        // Predicated region
        $region49: #{tpu_custom_call.1} parent=47 // pred_check
          %p291 = pneg %p40
        $region50: #{tpu_custom_call.1} parent=47 // pred_check_branch
          %293 = sbr.rel (%p291) target = $region52
        $region51: #{tpu_custom_call.1} parent=47 // pred_region
          %294 = dma.done [#allocation4], 16
        $region52: #{tpu_custom_call.1} parent=47 // pred_fallthru
          _
        %295 = sfence
        %p296 = pneg %p40
        %p297 = pneg %p37
        %p298 = scmp.lt.s32.totalorder %s24, 1
        %s299 = scalar_select %p298, %s24, 1
        %s300 = smul.addr %s299, 8
        %s301 = scalar_lea.vmem %s1, %s300
        %p302 = pneg %p66
        %p303 = pneg %p63
        %p304 = scmp.lt.s32.totalorder %s24, 1
        %s305 = scalar_select %p304, %s24, 1
        %s306 = smul.addr %s305, 8
        %s307 = scalar_lea.vmem %s2, %s306
        %p308 = pneg %p92
        %p309 = pneg %p89
        %p310 = pneg %p113
        %p311 = pneg %p110
        %p312 = pneg %p134
        %p313 = pneg %p131
        %p314 = pneg %p155
        %p315 = pneg %p152
        %p316 = pneg %p176
        %p317 = pneg %p173
        %p318 = pneg %p202
        %p319 = pneg %p199
        %s320 = sand.u32 %s189, 1
        %s321 = scalar_lea.sflag [#allocation3], %s320
        %s322 = sand.u32 %s189, 1
        %s323 = smul.addr %s322, 8
        %s324 = scalar_lea.vmem [#allocation5], %s323
        %p325 = pneg %p228
        %p326 = pneg %p225
        %p327 = scmp.lt.s32.totalorder %s24, 1
        %s328 = scalar_select %p327, %s24, 1
        %s329 = smul.addr %s328, 8
        %s330 = scalar_lea.vmem %s8, %s329
        %p331 = scmp.lt.s32.totalorder %s24, 1
        %s332 = scalar_select %p331, %s24, 1
        %s333 = smul.addr %s332, 8
        %s334 = scalar_lea.vmem %s1, %s333
        %p335 = scmp.lt.s32.totalorder %s24, 1
        %s336 = scalar_select %p335, %s24, 1
        %s337 = smul.addr %s336, 8
        %s338 = scalar_lea.vmem %s2, %s337
        %p339 = scmp.lt.s32.totalorder %s24, 1
        %s340 = scalar_select %p339, %s24, 1
        %s341 = smul.addr %s340, 8
        %s342 = scalar_lea.vmem %s8, %s341
        %s344 = sld [smem:[#allocation2]]
        %s345 = sld [smem:[#allocation2 + $0x1]]
        %v346 = vld [vmem:[%s334] sm:$0xff]
        %v347 = vpack.c.bf16 %v346, %v346
        %v348 = vld [vmem:[%s3] sm:$0xf]
        %v349 = vld [vmem:[%s3 + $0x4] sm:$0xf]
        %v350 = vld [vmem:[%s3 + $0x8] sm:$0xf]
        %v351 = vld [vmem:[%s3 + $0xc] sm:$0xf]
        %v352 = vld [vmem:[%s4] sm:$0x1]
        %v354 = vlaneseq
        %v355 = vshrl.u32 %v354, 7
        %v356 = vsub.s32 0, %v355
        %v357 = vrot.slane %v352, %v356
        %v363 = vunpack.c.l.b16 %v348
        %v364 = vunpack.c.l.b16 %v349
        %v365 = vunpack.c.l.b16 %v350
        %v366 = vunpack.c.l.b16 %v351
        %v367 = vpack.c.b16 %v364, %v363
        %v368 = vpack.c.b16 %v366, %v365
        %vm371 = vcmask 261120
        %v373 = vsel %vm371, %v347, 0
        %375 = vmatprep.subr.bf16.mxu0 0
        %376 = vmatpush1.bf16.msra.mxu0 %v367
        %377 = vmatprep.subr.bf16.mxu0 0
        %378 = vmatpush1.bf16.msra.mxu0 %v368
        %379 = vmatprep.subr.bf16.mxu0 0
        %380 = vmatpush1.bf16.msra.mxu0 0
        %381 = vmatprep.subr.bf16.mxu0 0
        %382 = vmatpush1.bf16.msra.mxu0 0
        %383 = vmatprep.subr.bf16.mxu0 0
        %384 = vmatpush1.bf16.msra.mxu0 0
        %385 = vmatprep.subr.bf16.mxu0 0
        %386 = vmatpush1.bf16.msra.mxu0 0
        %387 = vmatprep.subr.bf16.mxu0 0
        %388 = vmatpush1.bf16.msra.mxu0 0
        %389 = vmatprep.subr.bf16.mxu0 0
        %390 = vmatpush1.bf16.msra.mxu0 0
        %391 = vmatprep.subr.bf16.mxu0 0
        %392 = vmatpush1.bf16.msra.mxu0 0
        %393 = vmatprep.subr.bf16.mxu0 0
        %394 = vmatpush1.bf16.msra.mxu0 0
        %395 = vmatprep.subr.bf16.mxu0 0
        %396 = vmatpush1.bf16.msra.mxu0 0
        %397 = vmatprep.subr.bf16.mxu0 0
        %398 = vmatpush1.bf16.msra.mxu0 0
        %399 = vmatprep.subr.bf16.mxu0 0
        %400 = vmatpush1.bf16.msra.mxu0 0
        %401 = vmatprep.subr.bf16.mxu0 0
        %402 = vmatpush1.bf16.msra.mxu0 0
        %403 = vmatprep.subr.bf16.mxu0 0
        %404 = vmatpush1.bf16.msra.mxu0 0
        %405 = vmatprep.subr.bf16.mxu0 0
        %406 = vmatpush1.bf16.msra.mxu0 0
        %407 = vmatprep.mubr.bf16.mxu0 0
        %408 = vmatmul.mubr.bf16.gmra.mrb[0].mxu0 %v373
        %v409 = vpop.f32.mrb[0].mxu0
        %v410 = vadd.f32 %v357, %v409
        %v411 = vpop.f32.mrb[0].mxu0
        %v412 = vpop.f32.mrb[0].mxu0
        %v413 = vpop.f32.mrb[0].mxu0
        %414 = vdwg.mxu0
        %vm415 = vcmp.gt.f32.partialorder %v410, 0.0
        %v416 = vmul.f32 %v410, 0.01
        %v417 = vsel %vm415, %v410, %v416
        %v418 = vld [vmem:[%s5] sm:$0x1]
        %v420 = vlaneseq
        %v421 = vshrl.u32 %v420, 7
        %v422 = vsub.s32 0, %v421
        %v423 = vrot.slane %v418, %v422
        %v425 = vmul.f32 %v417, %v423
        %vm426 = vcmask 130048
        %v427 = vsel %vm426, %v425, 0.0
        %428 = vadd.xlane.f32.xlu0 %v427
        %v429 = vpop.xlane.xlu0 %428
        %v430 = vld [vmem:[%s6] sm:$0x1]
        %v432 = vlaneseq
        %v433 = vshrl.u32 %v432, 7
        %v434 = vsub.s32 0, %v433
        %v435 = vrot.slane %v430, %v434
        %v437 = vadd.f32 %v429, %v435
        %v438 = vstv %s344
        %v439 = vmul.f32 %v438, %v437
        %v440 = vld [vmem:[%s338] sm:$0xff]
        %v441 = vstv %s345
        %v442 = vmul.f32 %v441, %v440
        %v443 = vadd.f32 %v439, %v442
        %s444 = scalar_lea.vmem %s3, 16
        %v445 = vld [vmem:[%s444] sm:$0xf]
        %v446 = vld [vmem:[%s444 + $0x4] sm:$0xf]
        %v447 = vld [vmem:[%s444 + $0x8] sm:$0xf]
        %v448 = vld [vmem:[%s444 + $0xc] sm:$0xf]
        %s449 = scalar_lea.vmem %s4, 1
        %v450 = vld [vmem:[%s449] sm:$0x1]
        %v452 = vlaneseq
        %v453 = vshrl.u32 %v452, 7
        %v454 = vsub.s32 0, %v453
        %v455 = vrot.slane %v450, %v454
        %458 = vrot.lane.b32.xlu0 %v347, 96
        %v459 = vpop.permute.xlu0 %458
        %v464 = vunpack.c.l.b16 %v445
        %v465 = vunpack.c.l.b16 %v446
        %v466 = vunpack.c.l.b16 %v447
        %v467 = vunpack.c.l.b16 %v448
        %v468 = vpack.c.b16 %v465, %v464
        %v469 = vpack.c.b16 %v467, %v466
        %v473 = vsel %vm371, %v459, 0
        %475 = vmatprep.subr.bf16.mxu0 0
        %476 = vmatpush1.bf16.msra.mxu0 %v468
        %477 = vmatprep.subr.bf16.mxu0 0
        %478 = vmatpush1.bf16.msra.mxu0 %v469
        %479 = vmatprep.subr.bf16.mxu0 0
        %480 = vmatpush1.bf16.msra.mxu0 0
        %481 = vmatprep.subr.bf16.mxu0 0
        %482 = vmatpush1.bf16.msra.mxu0 0
        %483 = vmatprep.subr.bf16.mxu0 0
        %484 = vmatpush1.bf16.msra.mxu0 0
        %485 = vmatprep.subr.bf16.mxu0 0
        %486 = vmatpush1.bf16.msra.mxu0 0
        %487 = vmatprep.subr.bf16.mxu0 0
        %488 = vmatpush1.bf16.msra.mxu0 0
        %489 = vmatprep.subr.bf16.mxu0 0
        %490 = vmatpush1.bf16.msra.mxu0 0
        %491 = vmatprep.subr.bf16.mxu0 0
        %492 = vmatpush1.bf16.msra.mxu0 0
        %493 = vmatprep.subr.bf16.mxu0 0
        %494 = vmatpush1.bf16.msra.mxu0 0
        %495 = vmatprep.subr.bf16.mxu0 0
        %496 = vmatpush1.bf16.msra.mxu0 0
        %497 = vmatprep.subr.bf16.mxu0 0
        %498 = vmatpush1.bf16.msra.mxu0 0
        %499 = vmatprep.subr.bf16.mxu0 0
        %500 = vmatpush1.bf16.msra.mxu0 0
        %501 = vmatprep.subr.bf16.mxu0 0
        %502 = vmatpush1.bf16.msra.mxu0 0
        %503 = vmatprep.subr.bf16.mxu0 0
        %504 = vmatpush1.bf16.msra.mxu0 0
        %505 = vmatprep.subr.bf16.mxu0 0
        %506 = vmatpush1.bf16.msra.mxu0 0
        %507 = vmatprep.mubr.bf16.mxu0 0
        %508 = vmatmul.mubr.bf16.gmra.mrb[0].mxu0 %v473
        %v509 = vpop.f32.mrb[0].mxu0
        %v510 = vadd.f32 %v455, %v509
        %v511 = vpop.f32.mrb[0].mxu0
        %v512 = vpop.f32.mrb[0].mxu0
        %v513 = vpop.f32.mrb[0].mxu0
        %514 = vdwg.mxu0
        %vm515 = vcmp.gt.f32.partialorder %v510, 0.0
        %v516 = vmul.f32 %v510, 0.01
        %v517 = vsel %vm515, %v510, %v516
        %s518 = scalar_lea.vmem %s5, 1
        %v519 = vld [vmem:[%s518] sm:$0x1]
        %v521 = vlaneseq
        %v522 = vshrl.u32 %v521, 7
        %v523 = vsub.s32 0, %v522
        %v524 = vrot.slane %v519, %v523
        %v526 = vmul.f32 %v517, %v524
        %v527 = vsel %vm426, %v526, 0.0
        %528 = vadd.xlane.f32.xlu0 %v527
        %v529 = vpop.xlane.xlu0 %528
        %v530 = vadd.f32 %v529, %v435
        %v531 = vmul.f32 %v438, %v530
        %v532 = vadd.f32 %v531, %v442
        %s533 = scalar_lea.vmem %s3, 32
        %v534 = vld [vmem:[%s533] sm:$0xf]
        %v535 = vld [vmem:[%s533 + $0x4] sm:$0xf]
        %v536 = vld [vmem:[%s533 + $0x8] sm:$0xf]
        %v537 = vld [vmem:[%s533 + $0xc] sm:$0xf]
        %s538 = scalar_lea.vmem %s4, 2
        %v539 = vld [vmem:[%s538] sm:$0x1]
        %v541 = vlaneseq
        %v542 = vshrl.u32 %v541, 7
        %v543 = vsub.s32 0, %v542
        %v544 = vrot.slane %v539, %v543
        %546 = vrot.lane.b32.xlu0 %v347, 64
        %v547 = vpop.permute.xlu0 %546
        %v552 = vunpack.c.l.b16 %v534
        %v553 = vunpack.c.l.b16 %v535
        %v554 = vunpack.c.l.b16 %v536
        %v555 = vunpack.c.l.b16 %v537
        %v556 = vpack.c.b16 %v553, %v552
        %v557 = vpack.c.b16 %v555, %v554
        %v561 = vsel %vm371, %v547, 0
        %563 = vmatprep.subr.bf16.mxu0 0
        %564 = vmatpush1.bf16.msra.mxu0 %v556
        %565 = vmatprep.subr.bf16.mxu0 0
        %566 = vmatpush1.bf16.msra.mxu0 %v557
        %567 = vmatprep.subr.bf16.mxu0 0
        %568 = vmatpush1.bf16.msra.mxu0 0
        %569 = vmatprep.subr.bf16.mxu0 0
        %570 = vmatpush1.bf16.msra.mxu0 0
        %571 = vmatprep.subr.bf16.mxu0 0
        %572 = vmatpush1.bf16.msra.mxu0 0
        %573 = vmatprep.subr.bf16.mxu0 0
        %574 = vmatpush1.bf16.msra.mxu0 0
        %575 = vmatprep.subr.bf16.mxu0 0
        %576 = vmatpush1.bf16.msra.mxu0 0
        %577 = vmatprep.subr.bf16.mxu0 0
        %578 = vmatpush1.bf16.msra.mxu0 0
        %579 = vmatprep.subr.bf16.mxu0 0
        %580 = vmatpush1.bf16.msra.mxu0 0
        %581 = vmatprep.subr.bf16.mxu0 0
        %582 = vmatpush1.bf16.msra.mxu0 0
        %583 = vmatprep.subr.bf16.mxu0 0
        %584 = vmatpush1.bf16.msra.mxu0 0
        %585 = vmatprep.subr.bf16.mxu0 0
        %586 = vmatpush1.bf16.msra.mxu0 0
        %587 = vmatprep.subr.bf16.mxu0 0
        %588 = vmatpush1.bf16.msra.mxu0 0
        %589 = vmatprep.subr.bf16.mxu0 0
        %590 = vmatpush1.bf16.msra.mxu0 0
        %591 = vmatprep.subr.bf16.mxu0 0
        %592 = vmatpush1.bf16.msra.mxu0 0
        %593 = vmatprep.subr.bf16.mxu0 0
        %594 = vmatpush1.bf16.msra.mxu0 0
        %595 = vmatprep.mubr.bf16.mxu0 0
        %596 = vmatmul.mubr.bf16.gmra.mrb[0].mxu0 %v561
        %v597 = vpop.f32.mrb[0].mxu0
        %v598 = vadd.f32 %v544, %v597
        %v599 = vpop.f32.mrb[0].mxu0
        %v600 = vpop.f32.mrb[0].mxu0
        %v601 = vpop.f32.mrb[0].mxu0
        %602 = vdwg.mxu0
        %vm603 = vcmp.gt.f32.partialorder %v598, 0.0
        %v604 = vmul.f32 %v598, 0.01
        %v605 = vsel %vm603, %v598, %v604
        %s606 = scalar_lea.vmem %s5, 2
        %v607 = vld [vmem:[%s606] sm:$0x1]
        %v609 = vlaneseq
        %v610 = vshrl.u32 %v609, 7
        %v611 = vsub.s32 0, %v610
        %v612 = vrot.slane %v607, %v611
        %v614 = vmul.f32 %v605, %v612
        %v615 = vsel %vm426, %v614, 0.0
        %616 = vadd.xlane.f32.xlu0 %v615
        %v617 = vpop.xlane.xlu0 %616
        %v618 = vadd.f32 %v617, %v435
        %v619 = vmul.f32 %v438, %v618
        %v620 = vadd.f32 %v619, %v442
        %622 = vrot.lane.b32.xlu0 %v532, 127
        %v623 = vpop.permute.xlu0 %622
        %v625 = vmax.f32 %v443, %v623
        %627 = vrot.lane.b32.xlu0 %v620, 126
        %v628 = vpop.permute.xlu0 %627
        %v630 = vmax.f32 %v625, %v628
        %v631 = vsub.f32 %v443, %v630
        %v632 = vmul.f32 %v631, 1.442695
        %v633 = vpow.pop %v632
        %635 = vrot.lane.b32.xlu0 %v630, 1
        %v636 = vpop.permute.xlu0 %635
        %v638 = vsub.f32 %v532, %v636
        %v639 = vmul.f32 %v638, 1.442695
        %v640 = vpow.pop %v639
        %641 = vrot.lane.b32.xlu0 %v630, 2
        %v642 = vpop.permute.xlu0 %641
        %v644 = vsub.f32 %v620, %v642
        %v645 = vmul.f32 %v644, 1.442695
        %v646 = vpow.pop %v645
        %648 = vrot.lane.b32.xlu0 %v640, 127
        %v649 = vpop.permute.xlu0 %648
        %v651 = vadd.f32 %v633, %v649
        %653 = vrot.lane.b32.xlu0 %v646, 126
        %v654 = vpop.permute.xlu0 %653
        %v656 = vadd.f32 %v651, %v654
        %v657 = vrcp.pop %v656
        %v658 = vmul.f32 1.0, %v657
        %v659 = vmul.f32 %v633, %v658
        %661 = vrot.lane.b32.xlu0 %v658, 1
        %v662 = vpop.permute.xlu0 %661
        %v664 = vmul.f32 %v640, %v662
        %665 = vrot.lane.b32.xlu0 %v658, 2
        %v666 = vpop.permute.xlu0 %665
        %v668 = vmul.f32 %v646, %v666
        %vm669 = vcmask 7168
        %v670 = vsel %vm669, %v659, %v664
        %vm671 = vcmask 15360
        %v672 = vsel %vm671, %v670, %v668
        %vm673 = vcmask 23552
        %674 = vst.msk [vmem:[%s342] sm:$0xff] %vm673, %v672
        %v675 = vlaneseq
        %v676 = vand.u32 %v675, 127
        %vm677 = vcmp.lt.s32.totalorder %v676, 32
        %679 = vset.pattern.permute.xlu0 0
        %680 = vperm.xlu0 %679, %v659
        %v681 = vpop.permute.xlu0 %680
        %vm683 = vcmp.lt.s32.totalorder %v676, 64
        %685 = vset.pattern.permute.xlu0 1
        %686 = vperm.xlu0 %685, %v664
        %v687 = vpop.permute.xlu0 %686
        %690 = vset.pattern.permute.xlu0 2
        %691 = vperm.xlu0 %690, %v668
        %v692 = vpop.permute.xlu0 %691
        %v694 = vsel %vm683, %v687, %v692
        %v695 = vsel %vm677, %v681, %v694
        %v696 = vld [vmem:[%s334] sm:$0xff]
        %v697 = vmul.f32 %v695, %v696
        %vm698 = vcmask 785408
        %699 = vst.msk [vmem:[%s324] sm:$0xff] %vm698, %v697
        %s700 = sand.u32 %s189, 1
        %s701 = scalar_lea.sflag [#allocation3], %s700
        %s702 = sand.u32 %s189, 1
        %s703 = smul.addr %s702, 8
        %s704 = scalar_lea.vmem [#allocation5], %s703
        %p705 = scmp.lt.s32.totalorder %s24, 1
        %s706 = scalar_select %p705, %s24, 1
        %s707 = smul.addr %s706, 8
        %s708 = scalar_lea.vmem %s8, %s707
        // Predicated region
        $region53: #{tpu_custom_call.1} parent=47 // pred_check
          %p709 = pneg %p199
        $region54: #{tpu_custom_call.1} parent=47 // pred_check_branch
          %711 = sbr.rel (%p709) target = $region56
        $region55: #{tpu_custom_call.1} parent=47 // pred_region
          %s713 = ssub.s32 128, 128
          %714 = vsyncadd %s701, %s713
          %s715 = smul.addr %s24, 128
          %s716 = scalar_lea.hbm %s7, %s715
          %s718 = sshll.u32 %s704, 4
          %s719 = int_to_ptr.vmem [resolvable:$true] %s718
          %721 = dma.vmem_to_hbm [thread:$0]  %s719, 128, %s716, %s701
        $region56: #{tpu_custom_call.1} parent=47 // pred_fallthru
          _
        // Predicated region
        $region57: #{tpu_custom_call.1} parent=47 // pred_check
          %p722 = pneg %p225
        $region58: #{tpu_custom_call.1} parent=47 // pred_check_branch
          %724 = sbr.rel (%p722) target = $region60
        $region59: #{tpu_custom_call.1} parent=47 // pred_region
          _
        $region60: #{tpu_custom_call.1} parent=47 // pred_fallthru
          _
      $region48: #{tpu_custom_call.1} parent=5 // pred_fallthru
        _
      %p725 = scmp.le.s32.totalorder 2, %s19
      // Predicated region
      $region61: #{tpu_custom_call.1} parent=5 // pred_check
        %p726 = pneg %p725
      $region62: #{tpu_custom_call.1} parent=5 // pred_check_branch
        %728 = sbr.rel (%p726) target = $region64
      $region63: #{tpu_custom_call.1} parent=5 // pred_region
        %s729 = ssub.s32 %s19, 2
        // Predicated region
        $region65: #{tpu_custom_call.1} parent=63 // pred_check
          %p730 = pneg %p205
        $region66: #{tpu_custom_call.1} parent=63 // pred_check_branch
          %732 = sbr.rel (%p730) target = $region68
        $region67: #{tpu_custom_call.1} parent=63 // pred_region
          %s733 = sand.u32 %s190, 1
          %s734 = scalar_lea.sflag [#allocation3], %s733
          %s735 = sand.u32 %s190, 1
          %s736 = smul.addr %s735, 8
          %s737 = scalar_lea.vmem [#allocation5], %s736
          %738 = dma.done %s734, 128
        $region68: #{tpu_custom_call.1} parent=63 // pred_fallthru
          _
        // Predicated region
        $region69: #{tpu_custom_call.1} parent=63 // pred_check
          %p739 = pneg %p231
        $region70: #{tpu_custom_call.1} parent=63 // pred_check_branch
          %741 = sbr.rel (%p739) target = $region72
        $region71: #{tpu_custom_call.1} parent=63 // pred_region
          %p742 = scmp.lt.s32.totalorder %s25, 1
          %s743 = scalar_select %p742, %s25, 1
          %s744 = smul.addr %s743, 8
          %s745 = scalar_lea.vmem %s8, %s744
        $region72: #{tpu_custom_call.1} parent=63 // pred_fallthru
          _
      $region64: #{tpu_custom_call.1} parent=5 // pred_fallthru
        _
    $region6: #{tpu_custom_call.1} parent=1 // loop_footer
      %s23 = sadd.s32 1, %s19
    $region7: #{tpu_custom_call.1} parent=1 // loop_footer_branch
      %18 = sbr.rel target = $region3
    $region8: #{tpu_custom_call.1} parent=1 // loop_exit
      _
    %746 = vsyncpa [#allocation3], 1
    %s747 = scalar_lea.sflag [#allocation3], 1
    %748 = vsyncpa %s747, 1
    %749 = vsyncpa [#allocation4], 1
    %s750 = scalar_lea.sflag [#allocation4], 1
    %751 = vsyncpa %s750, 1

</llo_original>
